<compile_context>
chip_gen: v7x
topology: tpu7x:2x2x1
jax: 0.10.0
libtpu: 0.0.40
codegen_flags: <defaults>
</compile_context>

<pallas_src>
import functools
import math

import jax
import jax.numpy as jnp
from jax.experimental import pallas as pl
from jax.experimental.pallas import tpu as pltpu


# ----------------------------- Pallas kernels ------------------------------

def _linear_kernel(x_ref, w_ref, b_ref, o_ref):
    o_ref[...] = (jnp.dot(x_ref[...], w_ref[...], preferred_element_type=jnp.float32)
                  + b_ref[...])


def pallas_linear(x, w, b):
    """y = x @ w + b.  w is pre-transposed (in_features, out_features)."""
    # TODO(synk): tile rows with a grid + 'parallel' semantics once N grows past a few
    # hundred rows; at these shapes a single whole-array VMEM block is optimal.
    n, fout = x.shape[0], w.shape[1]
    return pl.pallas_call(
        _linear_kernel,
        out_shape=jax.ShapeDtypeStruct((n, fout), jnp.float32),
        in_specs=[pl.BlockSpec(memory_space=pltpu.MemorySpace.VMEM)] * 3,
        out_specs=pl.BlockSpec(memory_space=pltpu.MemorySpace.VMEM),
    )(x, w, b)


def _lin_relu_bn_kernel(x_ref, w_ref, b_ref, g_ref, bb_ref, o_ref, *, do_bn):
    y = jnp.dot(x_ref[...], w_ref[...], preferred_element_type=jnp.float32) + b_ref[...]
    y = jnp.maximum(y, 0.0)                                   # relu_()
    if do_bn:                                                 # train-mode BatchNorm1d
        n = y.shape[0]
        mean = jnp.sum(y, axis=0, keepdims=True) * (1.0 / n)
        yc = y - mean
        var = jnp.sum(yc * yc, axis=0, keepdims=True) * (1.0 / n)   # biased variance
        y = yc * jax.lax.rsqrt(var + 1e-5) * g_ref[...] + bb_ref[...]
    o_ref[...] = y


def pallas_lin_relu_bn(x, w, b, gamma, beta, do_bn):
    n, fout = x.shape[0], w.shape[1]
    return pl.pallas_call(
        functools.partial(_lin_relu_bn_kernel, do_bn=do_bn),
        out_shape=jax.ShapeDtypeStruct((n, fout), jnp.float32),
        in_specs=[pl.BlockSpec(memory_space=pltpu.MemorySpace.VMEM)] * 5,
        out_specs=pl.BlockSpec(memory_space=pltpu.MemorySpace.VMEM),
    )(x, w, b, gamma, beta)


_SQRT2 = math.sqrt(2.0)


def _erf(x):
    # Abramowitz & Stegun 7.1.26, |err| < 1.5e-7 (f32-exact for our purposes).
    # lax.erf has no guaranteed Mosaic lowering; polynomial is off-critical-path filler.
    a1, a2, a3, a4, a5 = 0.254829592, -0.284496736, 1.421413741, -1.453152027, 1.061405429
    p = 0.3275911
    sgn = jnp.where(x >= 0.0, 1.0, -1.0)
    ax = jnp.abs(x)
    t = 1.0 / (1.0 + p * ax)
    poly = ((((a5 * t + a4) * t + a3) * t + a2) * t + a1) * t
    return sgn * (1.0 - poly * jnp.exp(-ax * ax))


def _gelu_exact(x):
    # torch.nn.functional.gelu default ('none' approximation).
    return 0.5 * x * (1.0 + _erf(x / _SQRT2))


def _hgt_dst_kernel(q_ref, k_ref, v_ref, cnt_ref, x_ref, wa_ref, ba_ref, alpha_ref,
                    o_ref, *, heads, head_dim):
    """One destination node type.  Grid axis 0 = incoming edge type (accumulator axis):
    the output block is identical across grid steps, so it stays resident in VMEM and
    carries the group='sum' accumulation; the gelu -> a_lin -> skip epilogue runs on the
    final grid step."""
    e = pl.program_id(0)

    @pl.when(e == 0)
    def _():
        o_ref[...] = jnp.zeros_like(o_ref)

    q = q_ref[...]        # (Nd, H*D)
    k = k_ref[0]          # (Ns, H*D)  already a_rel * p_rel/sqrt(D) transformed
    v = v_ref[0]          # (Ns, H*D)  already m_rel transformed
    cnt = cnt_ref[0]      # (Nd, Ns)   edge multiplicities (0 => no edge / padding)
    has_edge = cnt > 0.0
    neg = jnp.float32(-1e30)

    outs = []
    for h in range(heads):                       # static unroll: all heads in one call
        lo, hi = h * head_dim, (h + 1) * head_dim
        s = jnp.dot(q[:, lo:hi], k[:, lo:hi].T,
                    preferred_element_type=jnp.float32)          # (Nd, Ns) logits
        s_m = jnp.where(has_edge, s, neg)
        row_max = jnp.max(s_m, axis=-1, keepdims=True)
        row_has = jnp.max(has_edge.astype(jnp.float32), axis=-1, keepdims=True) > 0.0
        row_max = jnp.where(row_has, row_max, 0.0)
        w = cnt * jnp.exp(jnp.where(has_edge, s - row_max, neg))
        denom = jnp.sum(w, axis=-1, keepdims=True)
        inv = jnp.where(denom > 0.0,
                        pl.reciprocal(jnp.where(denom > 0.0, denom, 1.0), approx=True),
                        0.0)
        outs.append(jnp.dot(w * inv, v[:, lo:hi], preferred_element_type=jnp.float32))
    o_ref[...] += jnp.concatenate(outs, axis=-1)                 # group='sum'

    @pl.when(e == pl.num_programs(0) - 1)
    def _():
        g = _gelu_exact(o_ref[...])
        y = jnp.dot(g, wa_ref[...], preferred_element_type=jnp.float32) + ba_ref[...]
        a = alpha_ref[...]                       # (1, H*D) row of sigmoid(skip)
        o_ref[...] = a * y + (1.0 - a) * x_ref[...]


def pallas_hgt_dst_conv(q, k_stack, v_stack, cnt_stack, x_dst, wa, ba, alpha_row, heads):
    n_et, ns, hd = k_stack.shape
    nd = q.shape[0]
    d = hd // heads
    return pl.pallas_call(
        functools.partial(_hgt_dst_kernel, heads=heads, head_dim=d),
        out_shape=jax.ShapeDtypeStruct((nd, hd), jnp.float32),
        grid=(n_et,),
        in_specs=[
            pl.BlockSpec((nd, hd), lambda e: (0, 0)),          # q (invariant)
            pl.BlockSpec((1, ns, hd), lambda e: (e, 0, 0)),    # k_rel per edge type
            pl.BlockSpec((1, ns, hd), lambda e: (e, 0, 0)),    # v_rel per edge type
            pl.BlockSpec((1, nd, ns), lambda e: (e, 0, 0)),    # edge-count matrix
            pl.BlockSpec((nd, hd), lambda e: (0, 0)),          # x_dst (skip branch)
            pl.BlockSpec((hd, hd), lambda e: (0, 0)),          # a_lin weight
            pl.BlockSpec((1, hd), lambda e: (0, 0)),           # a_lin bias
            pl.BlockSpec((1, hd), lambda e: (0, 0)),           # sigmoid(skip) row
        ],
        out_specs=pl.BlockSpec((nd, hd), lambda e: (0, 0)),    # resident accumulator
        compiler_params=pltpu.CompilerParams(dimension_semantics=("arbitrary",)),
    )(q, k_stack, v_stack, cnt_stack, x_dst, wa, ba, alpha_row)


# ------------------------- model (parameter setup / glue) ------------------

def init_params(key, node_types, edge_types, in_dims, channels, num_heads, num_layers):
    d = channels // num_heads

    def nxt():
        nonlocal key
        key, sub = jax.random.split(key)
        return sub

    params = {"lin": {}, "bn": {}, "convs": []}
    for nt in node_types:
        fin = in_dims[nt]
        params["lin"][nt] = {
            "w": jax.random.normal(nxt(), (fin, channels), jnp.float32) / math.sqrt(fin),
            "b": jnp.zeros((1, channels), jnp.float32),
        }
        params["bn"][nt] = {"gamma": jnp.ones((1, channels), jnp.float32),
                            "beta": jnp.zeros((1, channels), jnp.float32)}

    for _ in range(num_layers):
        layer = {"k": {}, "q": {}, "v": {}, "a_lin": {}, "skip": {},
                 "a_rel": {}, "m_rel": {}, "p_rel": {}}
        for nt in node_types:
            for name in ("k", "q", "v", "a_lin"):
                layer[name][nt] = {
                    "w": jax.random.normal(nxt(), (channels, channels), jnp.float32)
                    / math.sqrt(channels),
                    "b": jnp.zeros((1, channels), jnp.float32),
                }
            layer["skip"][nt] = jnp.float32(1.0)               # HGTConv reset: ones
        for et in edge_types:
            layer["a_rel"][et] = (jax.random.normal(nxt(), (num_heads, d, d), jnp.float32)
                                  / math.sqrt(d))
            layer["m_rel"][et] = (jax.random.normal(nxt(), (num_heads, d, d), jnp.float32)
                                  / math.sqrt(d))
            layer["p_rel"][et] = jnp.ones((num_heads,), jnp.float32)   # reset: ones
        params["convs"].append(layer)
    return params


def _block_diag_heads(a):
    """(H, D, D) -> (H*D, H*D) block diagonal (wrapper-side glue, O(C^2) elements)."""
    h, d, _ = a.shape
    out = jnp.zeros((h * d, h * d), a.dtype)
    for i in range(h):
        out = out.at[i * d:(i + 1) * d, i * d:(i + 1) * d].set(a[i])
    return out


def hgt_conv(layer, x_dict, cnt_dict, node_types, edge_types, num_heads, channels):
    d = channels // num_heads
    src_ets = {nt: [et for et in edge_types if et[0] == nt] for nt in node_types}
    dst_ets = {nt: [et for et in edge_types if et[2] == nt] for nt in node_types}

    # --- fold relation transforms into the projection weights, one fused matmul per node
    # type: proj = x @ [W_q | W_k@BD(a_rel*p/sqrt(D)) | W_v@BD(m_rel) | ...] + biases ---
    q_dict, k_rel, v_rel = {}, {}, {}
    for nt in node_types:
        w_cols = [layer["q"][nt]["w"]]
        b_cols = [layer["q"][nt]["b"]]
        for et in src_ets[nt]:
            bd_a = _block_diag_heads(
                layer["a_rel"][et] * (layer["p_rel"][et] / math.sqrt(d))[:, None, None])
            bd_m = _block_diag_heads(layer["m_rel"][et])
            w_cols += [layer["k"][nt]["w"] @ bd_a, layer["v"][nt]["w"] @ bd_m]
            b_cols += [layer["k"][nt]["b"] @ bd_a, layer["v"][nt]["b"] @ bd_m]
        proj = pallas_linear(x_dict[nt],
                             jnp.concatenate(w_cols, axis=1),
                             jnp.concatenate(b_cols, axis=1))
        q_dict[nt] = proj[:, :channels]
        for i, et in enumerate(src_ets[nt]):
            k_rel[et] = proj[:, channels * (1 + 2 * i):channels * (2 + 2 * i)]
            v_rel[et] = proj[:, channels * (2 + 2 * i):channels * (3 + 2 * i)]

    # --- one attention + epilogue kernel per destination node type ---
    out_dict = {}
    for nt in node_types:
        ets = dst_ets[nt]
        if not ets:
            out_dict[nt] = None               # matches PyG: dst type with no messages
            continue
        ns_max = max(x_dict[et[0]].shape[0] for et in ets)

        def pad_rows(a, n):
            return jnp.pad(a, ((0, n - a.shape[0]), (0, 0)))

        k_stack = jnp.stack([pad_rows(k_rel[et], ns_max) for et in ets])
        v_stack = jnp.stack([pad_rows(v_rel[et], ns_max) for et in ets])
        cnt_stack = jnp.stack([
            jnp.pad(cnt_dict[et], ((0, 0), (0, ns_max - cnt_dict[et].shape[1])))
            for et in ets])
        alpha_row = jnp.broadcast_to(jax.nn.sigmoid(layer["skip"][nt]),
                                     (1, channels)).astype(jnp.float32)
        out_dict[nt] = pallas_hgt_dst_conv(
            q_dict[nt], k_stack, v_stack, cnt_stack, x_dict[nt],
            layer["a_lin"][nt]["w"], layer["a_lin"][nt]["b"], alpha_row, num_heads)
    return out_dict


def hgt_forward(params, x_dict, edge_index_dict, node_types, edge_types,
                channels, num_heads, batch_size, num_nodes):
    # Dense edge-multiplicity matrices (edge_index[0]=src, edge_index[1]=dst).
    # TODO(synk): for large graphs replace with CSR-style scalar-prefetch + flash-style
    # tiled online softmax; the dense (Nd, Ns) formulation is O(N^2) VMEM.
    cnt_dict = {}
    for et, ei in edge_index_dict.items():
        src, _, dst = et
        cnt = jnp.zeros((num_nodes[dst], num_nodes[src]), jnp.float32)
        cnt_dict[et] = cnt.at[ei[1], ei[0]].add(1.0)

    do_bn = x_dict["question"].shape[0] == batch_size
    hdict = {nt: pallas_lin_relu_bn(x_dict[nt],
                                    params["lin"][nt]["w"], params["lin"][nt]["b"],
                                    params["bn"][nt]["gamma"], params["bn"][nt]["beta"],
                                    do_bn)
             for nt in node_types}

    for layer in params["convs"]:
        hdict = hgt_conv(layer, hdict, cnt_dict, node_types, edge_types,
                         num_heads, channels)
    return hdict


# --------------------------------- main -------------------------------------

if __name__ == "__main__":
    channels, num_heads, num_layers = 32, 2, 2
    node_types = ("question", "answer", "concept")
    edge_types = (
        ("question", "has", "answer"),
        ("answer", "rev_has", "question"),
        ("question", "mentions", "concept"),
        ("concept", "rev_mentions", "question"),
    )
    in_dims = {"question": 24, "answer": 12, "concept": 20}
    num_nodes = {"question": 8, "answer": 16, "concept": 12}
    batch_size = num_nodes["question"]            # triggers the BatchNorm branch
    num_edges = 24

    key = jax.random.PRNGKey(0)
    key, pkey = jax.random.split(key)
    params = init_params(pkey, node_types, edge_types, in_dims,
                         channels, num_heads, num_layers)

    x_dict = {}
    for nt in node_types:
        key, sub = jax.random.split(key)
        x_dict[nt] = jax.random.normal(sub, (num_nodes[nt], in_dims[nt]), jnp.float32)

    edge_index_dict = {}
    for et in edge_types:
        src, _, dst = et
        key, k1, k2 = jax.random.split(key, 3)
        edge_index_dict[et] = jnp.stack([
            jax.random.randint(k1, (num_edges,), 0, num_nodes[src]),
            jax.random.randint(k2, (num_edges,), 0, num_nodes[dst]),
        ]).astype(jnp.int32)

    out = hgt_forward(params, x_dict, edge_index_dict, node_types, edge_types,
                      channels, num_heads, batch_size, num_nodes)

    for nt in node_types:
        jax.block_until_ready(out[nt])
        assert out[nt].shape == (num_nodes[nt], channels)
    print("KERNEL_OK")
</pallas_src>

<mosaic_0001>
module attributes {stable_mosaic.version = 11 : i64} {
  func.func @_lin_relu_bn_kernel(%arg0: memref<8x24xf32, #tpu.memory_space<vmem>>, %arg1: memref<24x32xf32, #tpu.memory_space<vmem>>, %arg2: memref<1x32xf32, #tpu.memory_space<vmem>>, %arg3: memref<1x32xf32, #tpu.memory_space<vmem>>, %arg4: memref<1x32xf32, #tpu.memory_space<vmem>>, %arg5: memref<8x32xf32, #tpu.memory_space<vmem>>) attributes {dimension_semantics = [], scalar_prefetch = 0 : i64, scratch_operands = 0 : i64, tpu.core_type = #tpu.core_type<tc>} {
    %c0 = arith.constant 0 : index
    %c0_0 = arith.constant 0 : index
    %0 = vector.load %arg0[%c0, %c0_0] : memref<8x24xf32, #tpu.memory_space<vmem>>, vector<8x24xf32>
    %c0_1 = arith.constant 0 : index
    %c0_2 = arith.constant 0 : index
    %1 = vector.load %arg1[%c0_1, %c0_2] : memref<24x32xf32, #tpu.memory_space<vmem>>, vector<24x32xf32>
    %cst = arith.constant dense<0.000000e+00> : vector<8x32xf32>
    %2 = tpu.matmul %0, %1, %cst {dimension_numbers = #tpu.dot_dimension_numbers<[1], [0], [0], [1], [0, 0, 1, 1], [], []>} : vector<8x24xf32>, vector<24x32xf32>, vector<8x32xf32> -> vector<8x32xf32>
    %c0_3 = arith.constant 0 : index
    %c0_4 = arith.constant 0 : index
    %3 = vector.load %arg2[%c0_3, %c0_4] : memref<1x32xf32, #tpu.memory_space<vmem>>, vector<1x32xf32>
    %4 = vector.broadcast %3 : vector<1x32xf32> to vector<8x32xf32>
    %5 = arith.addf %2, %4 : vector<8x32xf32>
    %cst_5 = arith.constant 0.000000e+00 : f32
    %6 = vector.broadcast %cst_5 : f32 to vector<8x32xf32>
    %7 = arith.maximumf %5, %6 : vector<8x32xf32>
    %cst_6 = arith.constant dense<0.000000e+00> : vector<32xf32>
    %8 = vector.multi_reduction <add>, %7, %cst_6 [0] : vector<8x32xf32> to vector<32xf32>
    %9 = vector.shape_cast %8 : vector<32xf32> to vector<1x32xf32>
    %cst_7 = arith.constant 1.250000e-01 : f32
    %10 = vector.broadcast %cst_7 : f32 to vector<1x32xf32>
    %11 = arith.mulf %9, %10 : vector<1x32xf32>
    %12 = vector.broadcast %11 : vector<1x32xf32> to vector<8x32xf32>
    %13 = arith.subf %7, %12 : vector<8x32xf32>
    %14 = arith.mulf %13, %13 : vector<8x32xf32>
    %cst_8 = arith.constant dense<0.000000e+00> : vector<32xf32>
    %15 = vector.multi_reduction <add>, %14, %cst_8 [0] : vector<8x32xf32> to vector<32xf32>
    %16 = vector.shape_cast %15 : vector<32xf32> to vector<1x32xf32>
    %cst_9 = arith.constant 1.250000e-01 : f32
    %17 = vector.broadcast %cst_9 : f32 to vector<1x32xf32>
    %18 = arith.mulf %16, %17 : vector<1x32xf32>
    %cst_10 = arith.constant 9.99999974E-6 : f32
    %19 = vector.broadcast %cst_10 : f32 to vector<1x32xf32>
    %20 = arith.addf %18, %19 : vector<1x32xf32>
    %21 = math.rsqrt %20 : vector<1x32xf32>
    %22 = vector.broadcast %21 : vector<1x32xf32> to vector<8x32xf32>
    %23 = arith.mulf %13, %22 : vector<8x32xf32>
    %c0_11 = arith.constant 0 : index
    %c0_12 = arith.constant 0 : index
    %24 = vector.load %arg3[%c0_11, %c0_12] : memref<1x32xf32, #tpu.memory_space<vmem>>, vector<1x32xf32>
    %25 = vector.broadcast %24 : vector<1x32xf32> to vector<8x32xf32>
    %26 = arith.mulf %23, %25 : vector<8x32xf32>
    %c0_13 = arith.constant 0 : index
    %c0_14 = arith.constant 0 : index
    %27 = vector.load %arg4[%c0_13, %c0_14] : memref<1x32xf32, #tpu.memory_space<vmem>>, vector<1x32xf32>
    %28 = vector.broadcast %27 : vector<1x32xf32> to vector<8x32xf32>
    %29 = arith.addf %26, %28 : vector<8x32xf32>
    %c0_15 = arith.constant 0 : index
    %c0_16 = arith.constant 0 : index
    %30 = vector.load %arg5[%c0_15, %c0_16] : memref<8x32xf32, #tpu.memory_space<vmem>>, vector<8x32xf32>
    tpu.vector_store %arg5[%c0_15, %c0_16], %29 {strides = array<i32>} : memref<8x32xf32, #tpu.memory_space<vmem>>, vector<8x32xf32>,
    return
  }
}

</mosaic_0001>

<llo_original>
// kernel: tpu_custom_call.1
$region0: #{tpu_custom_call.1}
  #allocation0 [shape = 'u32[]', space=smem, size = 0x4, offset = 0x4, fixed_abs, tag = 'smem constant byte address 0x4 - core index']
  #allocation1 [shape = 'u32[144,128]{1,0:T(1,128)}', space=vmem, size = 0x12000, scoped, tag = 'internal scratch']
  %s0 = inlined_call_operand.hbm [shape: f32[8,24], index: 0, kind: input, shape index: {}]
  %s1 = inlined_call_operand.hbm [shape: f32[24,32], index: 1, kind: input, shape index: {}]
  %s2 = inlined_call_operand.vmem [shape: f32[1,32], index: 2, kind: input, shape index: {}]
  %s3 = inlined_call_operand.vmem [shape: f32[1,32], index: 3, kind: input, shape index: {}]
  %s4 = inlined_call_operand.vmem [shape: f32[1,32], index: 4, kind: input, shape index: {}]
  %s5 = inlined_call_operand.hbm [shape: f32[8,32], index: 5, kind: output, shape index: {}]
  %s6 = sld [smem:[#allocation0]]
  $region38: #{tpu_custom_call.1} parent=0
    _
  %s8 = ssub.s32 1, %s6
  %s9 = scalar_select 0, %s8, %s6
  $region1: #{tpu_custom_call.1} parent=0
    #allocation2 [shape = 'u8[4096]{0}', space=vmem, size = 0x1000, scoped, tag = 'input window, operand 0, single buffered']
    #allocation3 [shape = 's32[1]{0}', space=sflag, size = 0x4, scoped, tag = 'scoped memory for tpu_custom_call.1']
    #allocation4 [shape = 's32[1]{0}', space=sflag, size = 0x4, scoped, tag = 'scoped memory for tpu_custom_call.1']
    #allocation5 [shape = 'u8[12288]{0}', space=vmem, size = 0x3000, scoped, tag = 'input window, operand 1, single buffered']
    #allocation6 [shape = 's32[1]{0}', space=sflag, size = 0x4, scoped, tag = 'scoped memory for tpu_custom_call.1']
    #allocation7 [shape = 'u8[4096]{0}', space=vmem, size = 0x1000, scoped, tag = 'output window, operand 0, single buffered']
    %10 = vsyncpa [#allocation3], 0
    %11 = vsyncpa [#allocation6], 0
    %12 = vsyncpa [#allocation4], 0
    // Predicated region
    $region2: #{tpu_custom_call.1} parent=1 // pred_check
      _
    $region3: #{tpu_custom_call.1} parent=1 // pred_check_branch
      %14 = sbr.rel (0) target = $region5
    $region4: #{tpu_custom_call.1} parent=1 // pred_region
      %s16 = ssub.s32 128, 128
      %17 = vsyncadd [#allocation3], %s16
      %s19 = sshll.u32 [#allocation2], 4
      %s20 = int_to_ptr.vmem [resolvable:$true] %s19
      %22 = dma.hbm_to_vmem [thread:$0]  %s0, 128, %s20, [#allocation3]
    $region5: #{tpu_custom_call.1} parent=1 // pred_fallthru
      _
    // Predicated region
    $region6: #{tpu_custom_call.1} parent=1 // pred_check
      _
    $region7: #{tpu_custom_call.1} parent=1 // pred_check_branch
      %24 = sbr.rel (0) target = $region9
    $region8: #{tpu_custom_call.1} parent=1 // pred_region
      %s26 = ssub.s32 384, 384
      %27 = vsyncadd [#allocation6], %s26
      %s28 = sshll.u32 [#allocation5], 4
      %s29 = int_to_ptr.vmem [resolvable:$true] %s28
      %34 = dma.hbm_to_vmem [thread:$0]  %s1, 384, %s29, [#allocation6], 128, 128, 8
    $region9: #{tpu_custom_call.1} parent=1 // pred_fallthru
      _
    // Predicated region
    $region10: #{tpu_custom_call.1} parent=1 // pred_check
      _
    $region11: #{tpu_custom_call.1} parent=1 // pred_check_branch
      %36 = sbr.rel (0) target = $region13
    $region12: #{tpu_custom_call.1} parent=1 // pred_region
      _
    $region13: #{tpu_custom_call.1} parent=1 // pred_fallthru
      _
    // Predicated region
    $region14: #{tpu_custom_call.1} parent=1 // pred_check
      _
    $region15: #{tpu_custom_call.1} parent=1 // pred_check_branch
      %38 = sbr.rel (0) target = $region17
    $region16: #{tpu_custom_call.1} parent=1 // pred_region
      _
    $region17: #{tpu_custom_call.1} parent=1 // pred_fallthru
      _
    // Predicated region
    $region18: #{tpu_custom_call.1} parent=1 // pred_check
      _
    $region19: #{tpu_custom_call.1} parent=1 // pred_check_branch
      %40 = sbr.rel (0) target = $region21
    $region20: #{tpu_custom_call.1} parent=1 // pred_region
      _
    $region21: #{tpu_custom_call.1} parent=1 // pred_fallthru
      _
    // Predicated region
    $region22: #{tpu_custom_call.1} parent=1 // pred_check
      _
    $region23: #{tpu_custom_call.1} parent=1 // pred_check_branch
      %42 = sbr.rel (0) target = $region25
    $region24: #{tpu_custom_call.1} parent=1 // pred_region
      %43 = dma.done [#allocation3], 128
    $region25: #{tpu_custom_call.1} parent=1 // pred_fallthru
      _
    // Predicated region
    $region26: #{tpu_custom_call.1} parent=1 // pred_check
      _
    $region27: #{tpu_custom_call.1} parent=1 // pred_check_branch
      %45 = sbr.rel (0) target = $region29
    $region28: #{tpu_custom_call.1} parent=1 // pred_region
      %46 = dma.done [#allocation6], 384
    $region29: #{tpu_custom_call.1} parent=1 // pred_fallthru
      _
    %v47 = vld [vmem:[#allocation2] sm:$0xff]
    %v48 = vld [vmem:[#allocation5] sm:$0xff]
    %v49 = vld [vmem:[#allocation5 + $0x8] sm:$0xff]
    %v50 = vld [vmem:[#allocation5 + $0x10] sm:$0xff]
    %v51 = vld [vmem:[%s2] sm:$0x1]
    %v53 = vlaneseq
    %v54 = vshrl.u32 %v53, 7
    %v55 = vsub.s32 0, %v54
    %v56 = vrot.slane %v51, %v55
    %vm58 = vcmask 195584
    %v60 = vsel %vm58, %v47, 0
    %62 = vmatprep.subr.mxu0 0.0
    %63 = vmatpush1.msra.mxu0 %v48
    %64 = vmatprep.subr.mxu0 0.0
    %65 = vmatpush1.msra.mxu0 %v49
    %66 = vmatprep.subr.mxu0 0.0
    %67 = vmatpush1.msra.mxu0 %v50
    %68 = vmatprep.subr.mxu0 0.0
    %69 = vmatpush1.msra.mxu0 0.0
    %70 = vmatprep.subr.mxu0 0.0
    %71 = vmatpush1.msra.mxu0 0.0
    %72 = vmatprep.subr.mxu0 0.0
    %73 = vmatpush1.msra.mxu0 0.0
    %74 = vmatprep.subr.mxu0 0.0
    %75 = vmatpush1.msra.mxu0 0.0
    %76 = vmatprep.subr.mxu0 0.0
    %77 = vmatpush1.msra.mxu0 0.0
    %78 = vmatprep.subr.mxu0 0.0
    %79 = vmatpush1.msra.mxu0 0.0
    %80 = vmatprep.subr.mxu0 0.0
    %81 = vmatpush1.msra.mxu0 0.0
    %82 = vmatprep.subr.mxu0 0.0
    %83 = vmatpush1.msra.mxu0 0.0
    %84 = vmatprep.subr.mxu0 0.0
    %85 = vmatpush1.msra.mxu0 0.0
    %86 = vmatprep.subr.mxu0 0.0
    %87 = vmatpush1.msra.mxu0 0.0
    %88 = vmatprep.subr.mxu0 0.0
    %89 = vmatpush1.msra.mxu0 0.0
    %90 = vmatprep.subr.mxu0 0.0
    %91 = vmatpush1.msra.mxu0 0.0
    %92 = vmatprep.subr.mxu0 0.0
    %93 = vmatpush1.msra.mxu0 0.0
    %94 = vmatprep.subr.mxu0 0.0
    %95 = vmatpush1.msra.mxu0 0.0
    %96 = vmatprep.subr.mxu0 0.0
    %97 = vmatpush1.msra.mxu0 0.0
    %98 = vmatprep.subr.mxu0 0.0
    %99 = vmatpush1.msra.mxu0 0.0
    %100 = vmatprep.subr.mxu0 0.0
    %101 = vmatpush1.msra.mxu0 0.0
    %102 = vmatprep.subr.mxu0 0.0
    %103 = vmatpush1.msra.mxu0 0.0
    %104 = vmatprep.subr.mxu0 0.0
    %105 = vmatpush1.msra.mxu0 0.0
    %106 = vmatprep.subr.mxu0 0.0
    %107 = vmatpush1.msra.mxu0 0.0
    %108 = vmatprep.subr.mxu0 0.0
    %109 = vmatpush1.msra.mxu0 0.0
    %110 = vmatprep.subr.mxu0 0.0
    %111 = vmatpush1.msra.mxu0 0.0
    %112 = vmatprep.subr.mxu0 0.0
    %113 = vmatpush1.msra.mxu0 0.0
    %114 = vmatprep.subr.mxu0 0.0
    %115 = vmatpush1.msra.mxu0 0.0
    %116 = vmatprep.subr.mxu0 0.0
    %117 = vmatpush1.msra.mxu0 0.0
    %118 = vmatprep.subr.mxu0 0.0
    %119 = vmatpush1.msra.mxu0 0.0
    %120 = vmatprep.subr.mxu0 0.0
    %121 = vmatpush1.msra.mxu0 0.0
    %122 = vmatprep.subr.mxu0 0.0
    %123 = vmatpush1.msra.mxu0 0.0
    %124 = vmatprep.subr.mxu0 0.0
    %125 = vmatpush1.msra.mxu0 0.0
    %126 = vmatprep.mubr.f32.mxu0 0.0
    %127 = vmatmul.mubr.f32.gmra.mrb[0].mxu0 %v60
    %v128 = vpop.f32.mrb[0].mxu0
    %v129 = vadd.f32 %v56, %v128
    %v130 = vpop.f32.mrb[0].mxu0
    %131 = vdwg.mxu0
    %v132 = vmax.f32 %v129, 0.0
    %vm133 = vcmask 261120
    %v134 = vsel %vm133, %v132, 0.0
    %v135 = vrot.slane %v134, 4
    %v136 = vadd.f32 %v134, %v135
    %v137 = vrot.slane %v136, 2
    %v138 = vadd.f32 %v136, %v137
    %v139 = vrot.slane %v138, 1
    %v140 = vadd.f32 %v138, %v139
    %v141 = vmul.f32 %v140, 0.125
    %v142 = vsub.f32 %v132, %v141
    %v143 = vmul.f32 %v142, %v142
    %v144 = vsel %vm133, %v143, 0.0
    %v145 = vrot.slane %v144, 4
    %v146 = vadd.f32 %v144, %v145
    %v147 = vrot.slane %v146, 2
    %v148 = vadd.f32 %v146, %v147
    %v149 = vrot.slane %v148, 1
    %v150 = vadd.f32 %v148, %v149
    %v151 = vmul.f32 %v150, 0.125
    %v152 = vadd.f32 %v151, 1e-05
    %v153 = vrsqrt.pop %v152
    %v154 = vmul.f32 %v142, %v153
    %v155 = vld [vmem:[%s3] sm:$0x1]
    %v157 = vlaneseq
    %v158 = vshrl.u32 %v157, 7
    %v159 = vsub.s32 0, %v158
    %v160 = vrot.slane %v155, %v159
    %v162 = vmul.f32 %v154, %v160
    %v163 = vld [vmem:[%s4] sm:$0x1]
    %v165 = vlaneseq
    %v166 = vshrl.u32 %v165, 7
    %v167 = vsub.s32 0, %v166
    %v168 = vrot.slane %v163, %v167
    %v170 = vadd.f32 %v162, %v168
    %171 = vst.msk [vmem:[#allocation7] sm:$0xff] %vm133, %v170
    // Predicated region
    $region30: #{tpu_custom_call.1} parent=1 // pred_check
      _
    $region31: #{tpu_custom_call.1} parent=1 // pred_check_branch
      %173 = sbr.rel (0) target = $region33
    $region32: #{tpu_custom_call.1} parent=1 // pred_region
      %s175 = ssub.s32 128, 128
      %176 = vsyncadd [#allocation4], %s175
      %s178 = sshll.u32 [#allocation7], 4
      %s179 = int_to_ptr.vmem [resolvable:$true] %s178
      %181 = dma.vmem_to_hbm [thread:$0]  %s179, 128, %s5, [#allocation4]
    $region33: #{tpu_custom_call.1} parent=1 // pred_fallthru
      _
    // Predicated region
    $region34: #{tpu_custom_call.1} parent=1 // pred_check
      _
    $region35: #{tpu_custom_call.1} parent=1 // pred_check_branch
      %183 = sbr.rel (0) target = $region37
    $region36: #{tpu_custom_call.1} parent=1 // pred_region
      %184 = dma.done [#allocation4], 128
    $region37: #{tpu_custom_call.1} parent=1 // pred_fallthru
      _
    %185 = vsyncpa [#allocation3], 1
    %186 = vsyncpa [#allocation6], 1
    %187 = vsyncpa [#allocation4], 1

</llo_original>
